<compile_context>
chip_gen: v7x
topology: tpu7x:2x2x1
jax: 0.10.0
libtpu: 0.0.40
codegen_flags: <defaults>
</compile_context>

<pallas_src>
import functools

import jax
import jax.numpy as jnp
from jax.experimental import pallas as pl
from jax.experimental.pallas import tpu as pltpu


def _gdn_kernel(x_ref, gamma_ref, beta_ref, o_ref):
    # x_ref:     (C, T)  activations for T pixels of one batch element
    # gamma_ref: (C, C)  effective gamma matrix, laid out (out_ch, in_ch)
    # beta_ref:  (C, 1)  bias (broadcasts over the lane/pixel axis)
    x = x_ref[...]
    xsq = (x * x).astype(jnp.float32)
    # 1x1 conv over channels == matmul on the channel axis (MXU).
    norm = jnp.dot(gamma_ref[...].astype(jnp.float32), xsq,
                   preferred_element_type=jnp.float32)
    norm = norm + beta_ref[...].astype(jnp.float32)
    o_ref[...] = (x * jax.lax.rsqrt(norm)).astype(o_ref.dtype)


def _choose_lane_tile(n_channels, hw, itemsize,
                      budget_bytes=8 * 1024 * 1024, max_tile=32768):
    """Largest lane tile (multiple of 128) whose double-buffered in+out blocks
    fit in `budget_bytes`, capped by the padded spatial extent."""
    c_pad = ((n_channels + 7) // 8) * 8          # sublane padding
    per_lane = 2 * 2 * c_pad * itemsize          # (in + out) x double buffer
    t = max(128, (budget_bytes // per_lane) // 128 * 128)
    t = min(t, max_tile)
    hw_ceil = ((hw + 127) // 128) * 128
    return min(t, hw_ceil)


@functools.partial(jax.jit, static_argnames=("tile",))
def gdn_forward(x_nchw, gamma_mat, beta_col, tile=None):
    """x_nchw:    (B, C, H, W)
       gamma_mat: (C, C)  effective gamma, (out_ch, in_ch), already clamped
       beta_col:  (C, 1)  already clamped
       tile:      optional spatial (lane) tile override (multiple of 128).
    """
    B, C, H, W = x_nchw.shape
    HW = H * W
    x = x_nchw.reshape(B, C, HW)

    itemsize = jnp.dtype(x.dtype).itemsize
    if tile is None:
        lane_tile = _choose_lane_tile(C, HW, itemsize)
    else:
        lane_tile = min(int(tile), ((HW + 127) // 128) * 128)
        lane_tile = max(128, (lane_tile // 128) * 128)

    hw_pad = ((HW + lane_tile - 1) // lane_tile) * lane_tile
    if hw_pad != HW:
        # Padded pixels are zeros -> norm = beta > 0 -> output 0, no NaNs.
        x = jnp.pad(x, ((0, 0), (0, 0), (0, hw_pad - HW)))

    grid = (B, hw_pad // lane_tile)

    out = pl.pallas_call(
        _gdn_kernel,
        out_shape=jax.ShapeDtypeStruct((B, C, hw_pad), x.dtype),
        grid_spec=pltpu.PrefetchScalarGridSpec(
            num_scalar_prefetch=0,
            grid=grid,
            in_specs=[
                # batch dim squeezed out of the kernel view
                pl.BlockSpec((None, C, lane_tile), lambda b, t: (b, 0, t)),
                pl.BlockSpec((C, C), lambda b, t: (0, 0)),   # gamma (resident)
                pl.BlockSpec((C, 1), lambda b, t: (0, 0)),   # beta  (resident)
            ],
            out_specs=pl.BlockSpec((None, C, lane_tile), lambda b, t: (b, 0, t)),
        ),
        compiler_params=pltpu.CompilerParams(
            dimension_semantics=("parallel", "parallel"),
            vmem_limit_bytes=32 * 1024 * 1024,
        ),
    )(x, gamma_mat, beta_col)

    if hw_pad != HW:
        out = out[:, :, :HW]
    return out.reshape(B, C, H, W)


def make_gdn_params(n_channels,
                    gamma_init=0.1,
                    reparam_offset=2.0 ** (-18),
                    beta_min=1e-6,
                    apply_independently=False):
    """Deterministic parameter init mirroring GDN.initialise_params, followed by
    the clamps applied at the top of GDN.forward."""
    ro = reparam_offset
    beta_reparam = (beta_min + ro ** 2) ** 0.5

    eye = jnp.eye(n_channels, dtype=jnp.float32)
    # gamma = (sqrt(gamma_init*I + ro^2))^2 == gamma_init*I + ro^2 elementwise
    gamma_full = jnp.sqrt(gamma_init * eye + ro ** 2)
    gamma_full = gamma_full * gamma_full                      # (C_out, C_in)

    if apply_independently:
        # PyTorch: gamma[:, 0, :, :].unsqueeze(1) with groups=C (depthwise).
        # Effective channel-mixing matrix is diag of that column.
        w = jnp.maximum(gamma_full[:, 0], ro)
        gamma_mat = jnp.diag(w)                               # (C, C)
    else:
        gamma_mat = jnp.maximum(gamma_full, ro)               # (C_out, C_in)

    beta = jnp.sqrt(jnp.ones((n_channels,), jnp.float32) + ro ** 2)
    beta = jnp.maximum(beta, beta_reparam)

    return gamma_mat, beta.reshape(n_channels, 1)


def gdn_reference(x_nchw, gamma_mat, beta_col):
    """Pure-JAX reference (same math, no Pallas) for a sanity check."""
    B, C, H, W = x_nchw.shape
    xf = x_nchw.reshape(B, C, H * W)
    norm = jnp.einsum("ij,bjn->bin", gamma_mat, xf * xf) + beta_col[None]
    out = xf / jnp.sqrt(norm)
    return out.reshape(B, C, H, W)


if __name__ == "__main__":
    key = jax.random.PRNGKey(0)
    B, C, H, W = 2, 4, 16, 16
    x = jax.random.normal(key, (B, C, H, W), dtype=jnp.float32)

    gamma_mat, beta_col = make_gdn_params(C, apply_independently=False)

    out = gdn_forward(x, gamma_mat, beta_col)
    out = jax.block_until_ready(out)

    ref = gdn_reference(x, gamma_mat, beta_col)
    assert out.shape == (B, C, H, W)
    err = float(jnp.max(jnp.abs(out - ref)))
    assert err < 1e-4, err

    # Also exercise the depthwise (apply_independently=True) parameterization.
    gamma_d, beta_d = make_gdn_params(C, apply_independently=True)
    out_d = jax.block_until_ready(gdn_forward(x, gamma_d, beta_d))
    ref_d = gdn_reference(x, gamma_d, beta_d)
    err_d = float(jnp.max(jnp.abs(out_d - ref_d)))
    assert err_d < 1e-4, err_d

    print("KERNEL_OK")
</pallas_src>

<mosaic_0001>
module attributes {stable_mosaic.version = 11 : i64} {
  func.func @_gdn_kernel(%arg0: i32, %arg1: i32, %arg2: memref<1x4x256xf32, #tpu.memory_space<vmem>>, %arg3: memref<4x4xf32, #tpu.memory_space<vmem>>, %arg4: memref<4x1xf32, #tpu.memory_space<vmem>>, %arg5: memref<1x4x256xf32, #tpu.memory_space<vmem>>) attributes {dimension_semantics = [#tpu.dimension_semantics<parallel>, #tpu.dimension_semantics<parallel>], iteration_bounds = array<i64: 2, 1>, scalar_prefetch = 0 : i64, scratch_operands = 0 : i64, tpu.core_type = #tpu.core_type<tc>, window_params = [{transform_indices = @transform_0, window_bounds = array<i64: 1, 4, 256>}, {pipeline_mode = #tpu.pipeline_mode<synchronous>, transform_indices = @transform_1, window_bounds = array<i64: 4, 4>}, {pipeline_mode = #tpu.pipeline_mode<synchronous>, transform_indices = @transform_2, window_bounds = array<i64: 4, 1>}, {transform_indices = @transform_3, window_bounds = array<i64: 1, 4, 256>}]} {
    %c0 = arith.constant 0 : index
    %c0_0 = arith.constant 0 : index
    %c0_1 = arith.constant 0 : index
    %0 = vector.load %arg2[%c0, %c0_0, %c0_1] : memref<1x4x256xf32, #tpu.memory_space<vmem>>, vector<1x4x256xf32>
    %1 = vector.shape_cast %0 : vector<1x4x256xf32> to vector<4x256xf32>
    %2 = arith.mulf %1, %1 : vector<4x256xf32>
    %c0_2 = arith.constant 0 : index
    %c0_3 = arith.constant 0 : index
    %3 = vector.load %arg3[%c0_2, %c0_3] : memref<4x4xf32, #tpu.memory_space<vmem>>, vector<4x4xf32>
    %cst = arith.constant dense<0.000000e+00> : vector<4x256xf32>
    %4 = tpu.matmul %3, %2, %cst {dimension_numbers = #tpu.dot_dimension_numbers<[1], [0], [0], [1], [0, 0, 1, 1], [], []>} : vector<4x4xf32>, vector<4x256xf32>, vector<4x256xf32> -> vector<4x256xf32>
    %c0_4 = arith.constant 0 : index
    %c0_5 = arith.constant 0 : index
    %5 = vector.load %arg4[%c0_4, %c0_5] : memref<4x1xf32, #tpu.memory_space<vmem>>, vector<4x1xf32>
    %6 = vector.broadcast %5 : vector<4x1xf32> to vector<4x256xf32>
    %7 = arith.addf %4, %6 : vector<4x256xf32>
    %8 = math.rsqrt %7 : vector<4x256xf32>
    %9 = arith.mulf %1, %8 : vector<4x256xf32>
    %c0_6 = arith.constant 0 : index
    %c0_7 = arith.constant 0 : index
    %c0_8 = arith.constant 0 : index
    %10 = vector.load %arg5[%c0_6, %c0_7, %c0_8] : memref<1x4x256xf32, #tpu.memory_space<vmem>>, vector<1x4x256xf32>
    %11 = vector.shape_cast %10 : vector<1x4x256xf32> to vector<4x256xf32>
    %12 = vector.shape_cast %9 : vector<4x256xf32> to vector<1x4x256xf32>
    tpu.vector_store %arg5[%c0_6, %c0_7, %c0_8], %12 {strides = array<i32>} : memref<1x4x256xf32, #tpu.memory_space<vmem>>, vector<1x4x256xf32>,
    return
  }
  func.func @transform_0(%arg0: i32, %arg1: i32) -> (i32, i32, i32) {
    %c0_i32 = arith.constant 0 : i32
    %c0_i32_0 = arith.constant 0 : i32
    return %arg0, %c0_i32, %arg1 : i32, i32, i32
  }
  func.func @transform_1(%arg0: i32, %arg1: i32) -> (i32, i32) {
    %c0_i32 = arith.constant 0 : i32
    %c0_i32_0 = arith.constant 0 : i32
    %c0_i32_1 = arith.constant 0 : i32
    return %c0_i32, %c0_i32_0 : i32, i32
  }
  func.func @transform_2(%arg0: i32, %arg1: i32) -> (i32, i32) {
    %c0_i32 = arith.constant 0 : i32
    %c0_i32_0 = arith.constant 0 : i32
    %c0_i32_1 = arith.constant 0 : i32
    return %c0_i32, %c0_i32_0 : i32, i32
  }
  func.func @transform_3(%arg0: i32, %arg1: i32) -> (i32, i32, i32) {
    %c0_i32 = arith.constant 0 : i32
    %c0_i32_0 = arith.constant 0 : i32
    return %arg0, %c0_i32, %arg1 : i32, i32, i32
  }
}

</mosaic_0001>

<llo_original>
// kernel: gdn_forward.1
$region0: #{gdn_forward.1}
  #allocation0 [shape = 'u32[]', space=smem, size = 0x4, offset = 0x4, fixed_abs, tag = 'smem constant byte address 0x4 - core index']
  #allocation1 [shape = 'u32[144,128]{1,0:T(1,128)}', space=vmem, size = 0x12000, scoped, tag = 'internal scratch']
  %s0 = inlined_call_operand.vmem [shape: f32[2,4,256], index: 0, kind: input, shape index: {}]
  %s1 = inlined_call_operand.vmem [shape: f32[4,4], index: 1, kind: input, shape index: {}]
  %s2 = inlined_call_operand.vmem [shape: f32[4,1], index: 2, kind: input, shape index: {}]
  %s3 = inlined_call_operand.vmem [shape: f32[2,4,256], index: 3, kind: output, shape index: {}]
  %s4 = sld [smem:[#allocation0]]
  $region45: #{gdn_forward.1} parent=0
    _
  %s6 = ssub.s32 1, %s4
  %s7 = scalar_select 0, %s6, %s4
  loop: start=0, step=1, limit=4
  $region2: #{gdn_forward.1} parent=0 // loop_pre_header
    _
  $region3: #{gdn_forward.1} parent=0 // loop_header
    %s9 = sphi 0, %s13
    %p10 = scmp.ge.s32.totalorder %s9, 4
    %s16 = sphi 0, %s28
    %s17 = sphi 0, %s24
    %s18 = sphi 0, %s16
    %s19 = sphi 0, %s17
    %s20 = sphi 0, %s18
    %s21 = sphi 0, %s19
    %s33 = sphi 0, %s35
    %s36 = sphi 0, %s33
    %s37 = sphi 0, %s36
    %s53 = sphi 0, %s37
    %s57 = sphi 0, %s57
    %s59 = sphi 0, %s57
    %s60 = sphi 0, %s59
    %s74 = sphi 0, %s60
    %s78 = sphi 0, %s78
    %s80 = sphi 0, %s78
    %s81 = sphi 0, %s80
    %s95 = sphi 0, %s81
    %s103 = sphi 0, %s105
    %s106 = sphi 0, %s103
    %s107 = sphi 0, %s106
    %s123 = sphi 0, %s107
  $region4: #{gdn_forward.1} parent=0 // loop_header_branch
    %12 = sbr.rel (%p10) target = $region8
  $region5: #{gdn_forward.1} parent=0 // loop_body
    %s14 = ssub.s32 %s9, 1
    %s15 = ssub.s32 %s9, 2
    %s22 = sadd.s32 1, %s17
    %p23 = scmp.ge.s32.totalorder %s22, 1
    %s24 = scalar_select %p23, 0, %s22
    %s25 = sadd.s32 1, %s16
    %s26 = scalar_select %p23, %s25, %s16
    %p27 = scmp.ge.s32.totalorder %s26, 2
    %s28 = scalar_select %p27, 0, %s26
    %s29 = ssub.s32 %s16, %s28
    %s30 = ssub.s32 %s17, %s24
    %s31 = sor.u32 %s29, %s30
    %p32 = scmp.eq.s32.totalorder %s31, 0
    %s34 = sadd.s32 %s33, 1
    %s35 = scalar_select %p32, %s33, %s34
    %p38 = pneg %p32
    %p39 = scmp.eq.s32.totalorder %s9, 1
    %p40 = por %p38, %p39
    %p41 = scmp.ne.s32.totalorder %s33, %s36
    %p42 = scmp.eq.s32.totalorder %s9, 0
    %p43 = por %p41, %p42
    %p44 = scmp.ne.s32.totalorder %s33, %s36
    %p45 = scmp.eq.s32.totalorder %s14, 1
    %p46 = por %p44, %p45
    %p47 = scmp.ne.s32.totalorder %s36, %s37
    %p48 = scmp.eq.s32.totalorder %s14, 0
    %p49 = por %p47, %p48
    %p50 = scmp.ne.s32.totalorder %s36, %s37
    %p51 = scmp.eq.s32.totalorder %s15, 1
    %p52 = por %p50, %p51
    %p54 = scmp.ne.s32.totalorder %s37, %s53
    %p55 = scmp.eq.s32.totalorder %s15, 0
    %p56 = por %p54, %p55
    %s58 = sadd.s32 %s57, 1
    %p61 = scmp.eq.s32.totalorder %s9, 1
    %p62 = scmp.ne.s32.totalorder %s57, %s59
    %p63 = scmp.eq.s32.totalorder %s9, 0
    %p64 = por %p62, %p63
    %p65 = scmp.ne.s32.totalorder %s57, %s59
    %p66 = scmp.eq.s32.totalorder %s14, 1
    %p67 = por %p65, %p66
    %p68 = scmp.ne.s32.totalorder %s59, %s60
    %p69 = scmp.eq.s32.totalorder %s14, 0
    %p70 = por %p68, %p69
    %p71 = scmp.ne.s32.totalorder %s59, %s60
    %p72 = scmp.eq.s32.totalorder %s15, 1
    %p73 = por %p71, %p72
    %p75 = scmp.ne.s32.totalorder %s60, %s74
    %p76 = scmp.eq.s32.totalorder %s15, 0
    %p77 = por %p75, %p76
    %s79 = sadd.s32 %s78, 1
    %p82 = scmp.eq.s32.totalorder %s9, 1
    %p83 = scmp.ne.s32.totalorder %s78, %s80
    %p84 = scmp.eq.s32.totalorder %s9, 0
    %p85 = por %p83, %p84
    %p86 = scmp.ne.s32.totalorder %s78, %s80
    %p87 = scmp.eq.s32.totalorder %s14, 1
    %p88 = por %p86, %p87
    %p89 = scmp.ne.s32.totalorder %s80, %s81
    %p90 = scmp.eq.s32.totalorder %s14, 0
    %p91 = por %p89, %p90
    %p92 = scmp.ne.s32.totalorder %s80, %s81
    %p93 = scmp.eq.s32.totalorder %s15, 1
    %p94 = por %p92, %p93
    %p96 = scmp.ne.s32.totalorder %s81, %s95
    %p97 = scmp.eq.s32.totalorder %s15, 0
    %p98 = por %p96, %p97
    %s99 = ssub.s32 %s16, %s28
    %s100 = ssub.s32 %s17, %s24
    %s101 = sor.u32 %s99, %s100
    %p102 = scmp.eq.s32.totalorder %s101, 0
    %s104 = sadd.s32 %s103, 1
    %s105 = scalar_select %p102, %s103, %s104
    %p108 = pneg %p102
    %p109 = scmp.eq.s32.totalorder %s9, 1
    %p110 = por %p108, %p109
    %p111 = scmp.ne.s32.totalorder %s103, %s106
    %p112 = scmp.eq.s32.totalorder %s9, 0
    %p113 = por %p111, %p112
    %p114 = scmp.ne.s32.totalorder %s103, %s106
    %p115 = scmp.eq.s32.totalorder %s14, 1
    %p116 = por %p114, %p115
    %p117 = scmp.ne.s32.totalorder %s106, %s107
    %p118 = scmp.eq.s32.totalorder %s14, 0
    %p119 = por %p117, %p118
    %p120 = scmp.ne.s32.totalorder %s106, %s107
    %p121 = scmp.eq.s32.totalorder %s15, 1
    %p122 = por %p120, %p121
    %p124 = scmp.ne.s32.totalorder %s107, %s123
    %p125 = scmp.eq.s32.totalorder %s15, 0
    %p126 = por %p124, %p125
    %p127 = scmp.le.s32.totalorder 1, %s9
    %p128 = scmp.lt.s32.totalorder %s9, 3
    %p129 = pnand %p127, %p128
    %p130 = pneg %p129
    // Predicated region
    $region9: #{gdn_forward.1} parent=5 // pred_check
      _
    $region10: #{gdn_forward.1} parent=5 // pred_check_branch
      %132 = sbr.rel (%p129) target = $region12
    $region11: #{gdn_forward.1} parent=5 // pred_region
      %s133 = ssub.s32 %s9, 1
      // Predicated region
      $region13: #{gdn_forward.1} parent=11 // pred_check
        %p134 = pneg %p70
      $region14: #{gdn_forward.1} parent=11 // pred_check_branch
        %136 = sbr.rel (%p134) target = $region16
      $region15: #{gdn_forward.1} parent=11 // pred_region
        _
      $region16: #{gdn_forward.1} parent=11 // pred_fallthru
        _
      // Predicated region
      $region17: #{gdn_forward.1} parent=11 // pred_check
        %p137 = pneg %p91
      $region18: #{gdn_forward.1} parent=11 // pred_check_branch
        %139 = sbr.rel (%p137) target = $region20
      $region19: #{gdn_forward.1} parent=11 // pred_region
        _
      $region20: #{gdn_forward.1} parent=11 // pred_fallthru
        _
    $region12: #{gdn_forward.1} parent=5 // pred_fallthru
      _
    %p140 = scmp.lt.s32.totalorder %s9, 2
    // Predicated region
    $region21: #{gdn_forward.1} parent=5 // pred_check
      %p141 = pneg %p140
    $region22: #{gdn_forward.1} parent=5 // pred_check_branch
      %143 = sbr.rel (%p141) target = $region24
    $region23: #{gdn_forward.1} parent=5 // pred_region
      // Predicated region
      $region25: #{gdn_forward.1} parent=23 // pred_check
        %p144 = pneg %p43
      $region26: #{gdn_forward.1} parent=23 // pred_check_branch
        %146 = sbr.rel (%p144) target = $region28
      $region27: #{gdn_forward.1} parent=23 // pred_region
        %s147 = smul.u32 2, %s17
        %p148 = scmp.lt.s32.totalorder %s16, 1
        %s149 = scalar_select %p148, %s16, 1
        %p150 = scmp.lt.s32.totalorder %s147, 1
        %s151 = scalar_select %p150, %s147, 1
        %s152 = smul.addr %s149, 2
        %s153 = sadd.s32 %s151, %s152
        %s154 = smul.addr %s153, 4
        %s155 = scalar_lea.vmem %s0, %s154
        %s156 = smul.u32 2, %s17
      $region28: #{gdn_forward.1} parent=23 // pred_fallthru
        _
    $region24: #{gdn_forward.1} parent=5 // pred_fallthru
      _
    %p157 = scmp.le.s32.totalorder 1, %s9
    %p158 = scmp.lt.s32.totalorder %s9, 3
    %p159 = pnand %p157, %p158
    %p160 = pneg %p159
    // Predicated region
    $region29: #{gdn_forward.1} parent=5 // pred_check
      _
    $region30: #{gdn_forward.1} parent=5 // pred_check_branch
      %162 = sbr.rel (%p159) target = $region32
    $region31: #{gdn_forward.1} parent=5 // pred_region
      %s163 = ssub.s32 %s9, 1
      %s164 = smul.u32 2, %s19
      %p165 = scmp.lt.s32.totalorder %s18, 1
      %s166 = scalar_select %p165, %s18, 1
      %p167 = scmp.lt.s32.totalorder %s164, 1
      %s168 = scalar_select %p167, %s164, 1
      %s169 = smul.addr %s166, 2
      %s170 = sadd.s32 %s168, %s169
      %s171 = smul.addr %s170, 4
      %s172 = scalar_lea.vmem %s0, %s171
      %p173 = pneg %p49
      %p174 = pneg %p46
      %p175 = pneg %p70
      %p176 = pneg %p67
      %p177 = pneg %p91
      %p178 = pneg %p88
      %p179 = pneg %p119
      %p180 = pneg %p116
      %s181 = smul.u32 2, %s19
      %p182 = scmp.lt.s32.totalorder %s18, 1
      %s183 = scalar_select %p182, %s18, 1
      %p184 = scmp.lt.s32.totalorder %s181, 1
      %s185 = scalar_select %p184, %s181, 1
      %s186 = smul.addr %s183, 2
      %s187 = sadd.s32 %s185, %s186
      %s188 = smul.addr %s187, 4
      %s189 = scalar_lea.vmem %s3, %s188
      %s190 = smul.u32 2, %s19
      %p191 = scmp.lt.s32.totalorder %s18, 1
      %s192 = scalar_select %p191, %s18, 1
      %p193 = scmp.lt.s32.totalorder %s190, 1
      %s194 = scalar_select %p193, %s190, 1
      %s195 = smul.addr %s192, 2
      %s196 = sadd.s32 %s194, %s195
      %s197 = smul.addr %s196, 4
      %s198 = scalar_lea.vmem %s0, %s197
      %s199 = smul.u32 2, %s19
      %s200 = smul.u32 2, %s19
      %p201 = scmp.lt.s32.totalorder %s18, 1
      %s202 = scalar_select %p201, %s18, 1
      %p203 = scmp.lt.s32.totalorder %s200, 1
      %s204 = scalar_select %p203, %s200, 1
      %s205 = smul.addr %s202, 2
      %s206 = sadd.s32 %s204, %s205
      %s207 = smul.addr %s206, 4
      %s208 = scalar_lea.vmem %s3, %s207
      %s209 = smul.u32 2, %s19
      %v210 = vld [vmem:[%s198] sm:$0xff]
      %v211 = vmul.f32 %v210, %v210
      %v212 = vld [vmem:[%s1] sm:$0xf]
      %v213 = vld [vmem:[%s2] sm:$0xf]
      %215 = vset.pattern.permute.xlu0 0
      %216 = vperm.xlu0 %215, %v213
      %v217 = vpop.permute.xlu0 %216
      %v220 = vcombine.high %v211, %v211
      %vm221 = vcmask 31744
      %v223 = vsel %vm221, %v212, 0
      %vm225 = vcmask 1043456
      %v226 = vsel %vm225, %v211, 0
      %v228 = vsel %vm225, %v220, 0
      %230 = vmatprep.subr.mxu0 %v228
      %231 = vmatpush1.msra.mxu0 %v226
      %232 = vmatprep.subr.mxu0 0.0
      %233 = vmatpush1.msra.mxu0 0.0
      %234 = vmatprep.subr.mxu0 0.0
      %235 = vmatpush1.msra.mxu0 0.0
      %236 = vmatprep.subr.mxu0 0.0
      %237 = vmatpush1.msra.mxu0 0.0
      %238 = vmatprep.subr.mxu0 0.0
      %239 = vmatpush1.msra.mxu0 0.0
      %240 = vmatprep.subr.mxu0 0.0
      %241 = vmatpush1.msra.mxu0 0.0
      %242 = vmatprep.subr.mxu0 0.0
      %243 = vmatpush1.msra.mxu0 0.0
      %244 = vmatprep.subr.mxu0 0.0
      %245 = vmatpush1.msra.mxu0 0.0
      %246 = vmatprep.subr.mxu0 0.0
      %247 = vmatpush1.msra.mxu0 0.0
      %248 = vmatprep.subr.mxu0 0.0
      %249 = vmatpush1.msra.mxu0 0.0
      %250 = vmatprep.subr.mxu0 0.0
      %251 = vmatpush1.msra.mxu0 0.0
      %252 = vmatprep.subr.mxu0 0.0
      %253 = vmatpush1.msra.mxu0 0.0
      %254 = vmatprep.subr.mxu0 0.0
      %255 = vmatpush1.msra.mxu0 0.0
      %256 = vmatprep.subr.mxu0 0.0
      %257 = vmatpush1.msra.mxu0 0.0
      %258 = vmatprep.subr.mxu0 0.0
      %259 = vmatpush1.msra.mxu0 0.0
      %260 = vmatprep.subr.mxu0 0.0
      %261 = vmatpush1.msra.mxu0 0.0
      %262 = vmatprep.subr.mxu0 0.0
      %263 = vmatpush1.msra.mxu0 0.0
      %264 = vmatprep.subr.mxu0 0.0
      %265 = vmatpush1.msra.mxu0 0.0
      %266 = vmatprep.subr.mxu0 0.0
      %267 = vmatpush1.msra.mxu0 0.0
      %268 = vmatprep.subr.mxu0 0.0
      %269 = vmatpush1.msra.mxu0 0.0
      %270 = vmatprep.subr.mxu0 0.0
      %271 = vmatpush1.msra.mxu0 0.0
      %272 = vmatprep.subr.mxu0 0.0
      %273 = vmatpush1.msra.mxu0 0.0
      %274 = vmatprep.subr.mxu0 0.0
      %275 = vmatpush1.msra.mxu0 0.0
      %276 = vmatprep.subr.mxu0 0.0
      %277 = vmatpush1.msra.mxu0 0.0
      %278 = vmatprep.subr.mxu0 0.0
      %279 = vmatpush1.msra.mxu0 0.0
      %280 = vmatprep.subr.mxu0 0.0
      %281 = vmatpush1.msra.mxu0 0.0
      %282 = vmatprep.subr.mxu0 0.0
      %283 = vmatpush1.msra.mxu0 0.0
      %284 = vmatprep.subr.mxu0 0.0
      %285 = vmatpush1.msra.mxu0 0.0
      %286 = vmatprep.subr.mxu0 0.0
      %287 = vmatpush1.msra.mxu0 0.0
      %288 = vmatprep.subr.mxu0 0.0
      %289 = vmatpush1.msra.mxu0 0.0
      %290 = vmatprep.subr.mxu0 0.0
      %291 = vmatpush1.msra.mxu0 0.0
      %292 = vmatprep.subr.mxu0 0.0
      %293 = vmatpush1.msra.mxu0 0.0
      %294 = vmatprep.mubr.f32.mxu0 0.0
      %295 = vmatmul.mubr.f32.gmra.mrb[0].mxu0 %v223
      %v296 = vpop.f32.mrb[0].mxu0
      %v297 = vadd.f32 %v217, %v296
      %v298 = vpop.f32.mrb[0].mxu0
      %v299 = vadd.f32 %v217, %v298
      %300 = vdwg.mxu0
      %v301 = vrsqrt.pop %v297
      %v302 = vrsqrt.pop %v299
      %v305 = vcombine.low %v301, %v302
      %v307 = vmul.f32 %v210, %v305
      %308 = vst [vmem:[%s208] sm:$0xff] %v307
      %s309 = smul.u32 2, %s19
      %p310 = scmp.lt.s32.totalorder %s18, 1
      %s311 = scalar_select %p310, %s18, 1
      %p312 = scmp.lt.s32.totalorder %s309, 1
      %s313 = scalar_select %p312, %s309, 1
      %s314 = smul.addr %s311, 2
      %s315 = sadd.s32 %s313, %s314
      %s316 = smul.addr %s315, 4
      %s317 = scalar_lea.vmem %s3, %s316
      // Predicated region
      $region33: #{gdn_forward.1} parent=31 // pred_check
        %p318 = pneg %p116
      $region34: #{gdn_forward.1} parent=31 // pred_check_branch
        %320 = sbr.rel (%p318) target = $region36
      $region35: #{gdn_forward.1} parent=31 // pred_region
        %s321 = smul.u32 2, %s19
      $region36: #{gdn_forward.1} parent=31 // pred_fallthru
        _
    $region32: #{gdn_forward.1} parent=5 // pred_fallthru
      _
    %p322 = scmp.le.s32.totalorder 2, %s9
    // Predicated region
    $region37: #{gdn_forward.1} parent=5 // pred_check
      %p323 = pneg %p322
    $region38: #{gdn_forward.1} parent=5 // pred_check_branch
      %325 = sbr.rel (%p323) target = $region40
    $region39: #{gdn_forward.1} parent=5 // pred_region
      %s326 = ssub.s32 %s9, 2
      // Predicated region
      $region41: #{gdn_forward.1} parent=39 // pred_check
        %p327 = pneg %p122
      $region42: #{gdn_forward.1} parent=39 // pred_check_branch
        %329 = sbr.rel (%p327) target = $region44
      $region43: #{gdn_forward.1} parent=39 // pred_region
        %s330 = smul.u32 2, %s21
        %p331 = scmp.lt.s32.totalorder %s20, 1
        %s332 = scalar_select %p331, %s20, 1
        %p333 = scmp.lt.s32.totalorder %s330, 1
        %s334 = scalar_select %p333, %s330, 1
        %s335 = smul.addr %s332, 2
        %s336 = sadd.s32 %s334, %s335
        %s337 = smul.addr %s336, 4
        %s338 = scalar_lea.vmem %s3, %s337
      $region44: #{gdn_forward.1} parent=39 // pred_fallthru
        _
    $region40: #{gdn_forward.1} parent=5 // pred_fallthru
      _
  $region6: #{gdn_forward.1} parent=0 // loop_footer
    %s13 = sadd.s32 1, %s9
  $region7: #{gdn_forward.1} parent=0 // loop_footer_branch
    %8 = sbr.rel target = $region3
  $region8: #{gdn_forward.1} parent=0 // loop_exit
    _

</llo_original>
